<compile_context>
chip_gen: v7x
topology: tpu7x:2x2x1
jax: 0.10.0
libtpu: 0.0.40
codegen_flags: <defaults>
</compile_context>

<pallas_src>
from functools import partial

import jax
import jax.numpy as jnp
from jax.experimental import pallas as pl
from jax.experimental.pallas import tpu as pltpu


def _round_up(x, m):
    return (x + m - 1) // m * m


def _mf_kernel(uidx_ref, midx_ref, utab_hbm, mtab_hbm, out_ref,
               utab_vmem, mtab_vmem, copy_sem):
    # uidx_ref / midx_ref: (1, TB) int32, lane-dense batch tile of indices.
    # utab_hbm / mtab_hbm: (E_pad, N_pad) transposed tables, raw HBM refs.
    # out_ref            : (1, TB) f32 lane-dense rating row.
    # utab_vmem/mtab_vmem: single-buffered VMEM copies of the tables (scratch).

    # One-time (per core) table load into single-buffered VMEM scratch.  The
    # "arbitrary" inner grid axis guarantees every core executes step 0 first,
    # so this also works when the "parallel" axis is split across TensorCores.
    @pl.when(pl.program_id(1) == 0)
    def _load_tables():
        u_cp = pltpu.make_async_copy(utab_hbm, utab_vmem, copy_sem.at[0])
        m_cp = pltpu.make_async_copy(mtab_hbm, mtab_vmem, copy_sem.at[1])
        u_cp.start()
        m_cp.start()
        u_cp.wait()
        m_cp.wait()

    tb = uidx_ref.shape[-1]
    nu = utab_vmem.shape[-1]
    nm = mtab_vmem.shape[-1]
    tdtype = utab_vmem.dtype

    # One shared iota for both one-hot selectors (VPU work saved vs two iotas).
    # Out-of-range indices would select nothing and yield 0.0, where PyTorch
    # nn.Embedding raises; inputs are assumed validated.
    iota = jax.lax.broadcasted_iota(jnp.int32, (max(nu, nm), tb), 0)
    u_sel = (iota[:nu, :] == uidx_ref[...]).astype(tdtype)
    m_sel = (iota[:nm, :] == midx_ref[...]).astype(tdtype)

    # MXU gather: (E, N) @ (N, TB) -> (E, TB); embeddings are batch-lane-dense.
    u_embT = jnp.dot(utab_vmem[...], u_sel, preferred_element_type=jnp.float32)
    m_embT = jnp.dot(mtab_vmem[...], m_sel, preferred_element_type=jnp.float32)

    # Dot product over the embedding dim = sublane reduce -> (1, TB) row.
    out_ref[...] = jnp.sum(u_embT * m_embT, axis=0, keepdims=True)


def prepare_mf_tables(user_table, movie_table, table_dtype=jnp.float32):
    """One-time table prep: transpose + zero-pad to MXU-friendly layout.

    Call once (outside the per-step forward) and reuse the result — the
    full-table transpose/pad HBM traffic is paid here, not per forward call.
    Use table_dtype=jnp.bfloat16 for the fast/low-VMEM (non-bit-exact) path.
    """
    num_users, e = user_table.shape
    num_movies, e2 = movie_table.shape
    assert e == e2, "embedding sizes must match"
    ep = _round_up(e, 8)               # sublane alignment
    nup = _round_up(num_users, 128)    # lane-dense K dim for the user gather
    nmp = _round_up(num_movies, 128)   # lane-dense K dim for the movie gather
    utab_t = jnp.zeros((ep, nup), table_dtype).at[:e, :num_users].set(
        user_table.astype(table_dtype).T)
    mtab_t = jnp.zeros((ep, nmp), table_dtype).at[:e, :num_movies].set(
        movie_table.astype(table_dtype).T)
    return utab_t, mtab_t


@partial(jax.jit, static_argnames=("tb",))
def matrix_factorization_forward(user_idx, movie_idx, utab_t, mtab_t, *, tb=None):
    """Pallas forward. user_idx/movie_idx: (B,) int; utab_t/mtab_t from
    prepare_mf_tables. Returns (B,) f32 ratings."""
    b = user_idx.shape[0]
    ep, nup = utab_t.shape
    ep2, nmp = mtab_t.shape
    assert ep == ep2

    # Adaptive batch tile: 256 fills the 256-wide v6e/v7x MXU and amortizes the
    # per-grid-step overhead; 128 keeps >=2 slices at moderate batch sizes.
    if tb is None:
        tb = 256 if b > 256 else 128
    bp = _round_up(b, tb)
    grid_n = bp // tb
    # >=2 "parallel" slices when possible so both v7x TensorCores get work;
    # otherwise a single sequential core (v5e/v6e only have one TC anyway).
    n_cores = 2 if (grid_n >= 2 and grid_n % 2 == 0) else 1
    steps = grid_n // n_cores

    # Lane-major index layout: padded slots reuse index 0; their outputs are
    # throwaway work in the last tile and are sliced off below.
    uidx = jnp.zeros((bp,), jnp.int32).at[:b].set(user_idx.astype(jnp.int32))
    midx = jnp.zeros((bp,), jnp.int32).at[:b].set(movie_idx.astype(jnp.int32))
    uidx = uidx.reshape(n_cores, steps, 1, tb)
    midx = midx.reshape(n_cores, steps, 1, tb)

    # Explicit scoped-VMEM budget: single-buffered tables + small I/O blocks,
    # with generous headroom, capped well below any generation's physical VMEM.
    itemsize = jnp.dtype(utab_t.dtype).itemsize
    table_bytes = (ep * nup + ep * nmp) * itemsize
    io_bytes = 2 * (2 * tb * 4) + 2 * (tb * 4)   # double-buffered idx + out blocks
    vmem_limit = int(min(80 << 20, max(24 << 20, 2 * (table_bytes + io_bytes) + (4 << 20))))

    out = pl.pallas_call(
        _mf_kernel,
        out_shape=jax.ShapeDtypeStruct((n_cores, steps, 1, tb), jnp.float32),
        grid_spec=pltpu.PrefetchScalarGridSpec(
            num_scalar_prefetch=0,
            grid=(n_cores, steps),
            in_specs=[
                # Lane-dense index tiles; leading grid dims squeezed out.
                pl.BlockSpec((None, None, 1, tb), lambda c, t: (c, t, 0, 0)),
                pl.BlockSpec((None, None, 1, tb), lambda c, t: (c, t, 0, 0)),
                # Tables stay in HBM; DMA'd once per core into VMEM scratch.
                pl.BlockSpec(memory_space=pl.ANY),
                pl.BlockSpec(memory_space=pl.ANY),
            ],
            out_specs=pl.BlockSpec((None, None, 1, tb), lambda c, t: (c, t, 0, 0)),
            scratch_shapes=[
                pltpu.VMEM((ep, nup), utab_t.dtype),   # single-buffered user table^T
                pltpu.VMEM((ep, nmp), mtab_t.dtype),   # single-buffered movie table^T
                pltpu.SemaphoreType.DMA((2,)),
            ],
        ),
        compiler_params=pltpu.CompilerParams(
            dimension_semantics=("parallel", "arbitrary"),
            vmem_limit_bytes=vmem_limit,
        ),
    )(uidx, midx, utab_t, mtab_t)
    return out.reshape(bp)[:b]


if __name__ == "__main__":
    num_users = 64
    num_movies = 96
    embedding_size = 32
    batch = 256            # 2 batch tiles of 128 -> both v7x cores get a slice

    key = jax.random.PRNGKey(0)
    k_u, k_m, k_ui, k_mi = jax.random.split(key, 4)

    # nn.Embedding default init: weights ~ N(0, 1)
    user_table = jax.random.normal(k_u, (num_users, embedding_size), dtype=jnp.float32)
    movie_table = jax.random.normal(k_m, (num_movies, embedding_size), dtype=jnp.float32)

    user_idx = jax.random.randint(k_ui, (batch,), 0, num_users, dtype=jnp.int32)
    movie_idx = jax.random.randint(k_mi, (batch,), 0, num_movies, dtype=jnp.int32)

    # One-time table prep (transpose + pad), then the cheap per-step forward.
    utab_t, mtab_t = prepare_mf_tables(user_table, movie_table)  # f32 = bit-exact path
    rating = matrix_factorization_forward(user_idx, movie_idx, utab_t, mtab_t)
    rating = jax.block_until_ready(rating)

    # Pure-JAX reference check.
    ref = jnp.sum(user_table[user_idx] * movie_table[movie_idx], axis=1)
    assert rating.shape == (batch,)
    assert jnp.allclose(rating, ref, atol=1e-5, rtol=1e-5), "mismatch vs reference"

    print("KERNEL_OK")
</pallas_src>

<mosaic_0001>
module attributes {stable_mosaic.version = 11 : i64} {
  func.func @_mf_kernel(%arg0: i32, %arg1: i32, %arg2: memref<1x1x1x128xi32, #tpu.memory_space<vmem>>, %arg3: memref<1x1x1x128xi32, #tpu.memory_space<vmem>>, %arg4: memref<32x128xf32, #tpu.memory_space<any>>, %arg5: memref<32x128xf32, #tpu.memory_space<any>>, %arg6: memref<1x1x1x128xf32, #tpu.memory_space<vmem>>, %arg7: memref<32x128xf32, #tpu.memory_space<vmem>>, %arg8: memref<32x128xf32, #tpu.memory_space<vmem>>, %arg9: memref<2x!tpu.dma_semaphore, #tpu.memory_space<semaphore_mem>>) attributes {dimension_semantics = [#tpu.dimension_semantics<parallel>, #tpu.dimension_semantics<arbitrary>], iteration_bounds = array<i64: 2, 1>, scalar_prefetch = 0 : i64, scratch_operands = 3 : i64, tpu.core_type = #tpu.core_type<tc>, window_params = [{transform_indices = @transform_0, window_bounds = array<i64: 1, 1, 1, 128>}, {transform_indices = @transform_1, window_bounds = array<i64: 1, 1, 1, 128>}, {}, {}, {transform_indices = @transform_4, window_bounds = array<i64: 1, 1, 1, 128>}]} {
    %c0_i32 = arith.constant 0 : i32
    %0 = arith.cmpi eq, %arg1, %c0_i32 : i32
    %1 = arith.extui %0 : i1 to i32
    %c0_i32_0 = arith.constant 0 : i32
    %2 = arith.cmpi ne, %1, %c0_i32_0 : i32
    scf.if %2 {
      %c0_i32_18 = arith.constant 0 : i32
      %26 = tpu.memref_slice %arg9[%c0_i32_18] : memref<2x!tpu.dma_semaphore, #tpu.memory_space<semaphore_mem>> -> memref<1x!tpu.dma_semaphore, #tpu.memory_space<semaphore_mem>>
      %27 = tpu.memref_squeeze %26 : memref<1x!tpu.dma_semaphore, #tpu.memory_space<semaphore_mem>> -> memref<!tpu.dma_semaphore, #tpu.memory_space<semaphore_mem>>
      tpu.enqueue_dma source(%arg4 : memref<32x128xf32, #tpu.memory_space<any>>) target(%arg7 : memref<32x128xf32, #tpu.memory_space<vmem>>) target_semaphore(%27 : memref<!tpu.dma_semaphore, #tpu.memory_space<semaphore_mem>>)
      %c1_i32 = arith.constant 1 : i32
      %28 = tpu.memref_slice %arg9[%c1_i32] : memref<2x!tpu.dma_semaphore, #tpu.memory_space<semaphore_mem>> -> memref<1x!tpu.dma_semaphore, #tpu.memory_space<semaphore_mem>>
      %29 = tpu.memref_squeeze %28 : memref<1x!tpu.dma_semaphore, #tpu.memory_space<semaphore_mem>> -> memref<!tpu.dma_semaphore, #tpu.memory_space<semaphore_mem>>
      tpu.enqueue_dma source(%arg5 : memref<32x128xf32, #tpu.memory_space<any>>) target(%arg8 : memref<32x128xf32, #tpu.memory_space<vmem>>) target_semaphore(%29 : memref<!tpu.dma_semaphore, #tpu.memory_space<semaphore_mem>>)
      %c0_i32_19 = arith.constant 0 : i32
      %30 = tpu.memref_slice %arg9[%c0_i32_19] : memref<2x!tpu.dma_semaphore, #tpu.memory_space<semaphore_mem>> -> memref<1x!tpu.dma_semaphore, #tpu.memory_space<semaphore_mem>>
      %31 = tpu.memref_squeeze %30 : memref<1x!tpu.dma_semaphore, #tpu.memory_space<semaphore_mem>> -> memref<!tpu.dma_semaphore, #tpu.memory_space<semaphore_mem>>
      tpu.wait_dma2 semaphore(%31 : memref<!tpu.dma_semaphore, #tpu.memory_space<semaphore_mem>>) src(%arg4 : memref<32x128xf32, #tpu.memory_space<any>>) dst(%arg7 : memref<32x128xf32, #tpu.memory_space<vmem>>)
      %c1_i32_20 = arith.constant 1 : i32
      %32 = tpu.memref_slice %arg9[%c1_i32_20] : memref<2x!tpu.dma_semaphore, #tpu.memory_space<semaphore_mem>> -> memref<1x!tpu.dma_semaphore, #tpu.memory_space<semaphore_mem>>
      %33 = tpu.memref_squeeze %32 : memref<1x!tpu.dma_semaphore, #tpu.memory_space<semaphore_mem>> -> memref<!tpu.dma_semaphore, #tpu.memory_space<semaphore_mem>>
      tpu.wait_dma2 semaphore(%33 : memref<!tpu.dma_semaphore, #tpu.memory_space<semaphore_mem>>) src(%arg5 : memref<32x128xf32, #tpu.memory_space<any>>) dst(%arg8 : memref<32x128xf32, #tpu.memory_space<vmem>>)
    } else {
    }
    %3 = tpu.iota {dimensions = array<i32: 0>} : vector<128x128xi32>
    %c0 = arith.constant 0 : index
    %c0_1 = arith.constant 0 : index
    %c0_2 = arith.constant 0 : index
    %c0_3 = arith.constant 0 : index
    %4 = vector.load %arg2[%c0, %c0_1, %c0_2, %c0_3] : memref<1x1x1x128xi32, #tpu.memory_space<vmem>>, vector<1x1x1x128xi32>
    %5 = vector.shape_cast %4 : vector<1x1x1x128xi32> to vector<1x128xi32>
    %6 = vector.broadcast %5 : vector<1x128xi32> to vector<128x128xi32>
    %7 = arith.cmpi eq, %3, %6 : vector<128x128xi32>
    %8 = arith.extui %7 : vector<128x128xi1> to vector<128x128xi32>
    %9 = arith.sitofp %8 : vector<128x128xi32> to vector<128x128xf32>
    %c0_4 = arith.constant 0 : index
    %c0_5 = arith.constant 0 : index
    %c0_6 = arith.constant 0 : index
    %c0_7 = arith.constant 0 : index
    %10 = vector.load %arg3[%c0_4, %c0_5, %c0_6, %c0_7] : memref<1x1x1x128xi32, #tpu.memory_space<vmem>>, vector<1x1x1x128xi32>
    %11 = vector.shape_cast %10 : vector<1x1x1x128xi32> to vector<1x128xi32>
    %12 = vector.broadcast %11 : vector<1x128xi32> to vector<128x128xi32>
    %13 = arith.cmpi eq, %3, %12 : vector<128x128xi32>
    %14 = arith.extui %13 : vector<128x128xi1> to vector<128x128xi32>
    %15 = arith.sitofp %14 : vector<128x128xi32> to vector<128x128xf32>
    %c0_8 = arith.constant 0 : index
    %c0_9 = arith.constant 0 : index
    %16 = vector.load %arg7[%c0_8, %c0_9] : memref<32x128xf32, #tpu.memory_space<vmem>>, vector<32x128xf32>
    %cst = arith.constant dense<0.000000e+00> : vector<32x128xf32>
    %17 = tpu.matmul %16, %9, %cst {dimension_numbers = #tpu.dot_dimension_numbers<[1], [0], [0], [1], [0, 0, 1, 1], [], []>} : vector<32x128xf32>, vector<128x128xf32>, vector<32x128xf32> -> vector<32x128xf32>
    %c0_10 = arith.constant 0 : index
    %c0_11 = arith.constant 0 : index
    %18 = vector.load %arg8[%c0_10, %c0_11] : memref<32x128xf32, #tpu.memory_space<vmem>>, vector<32x128xf32>
    %cst_12 = arith.constant dense<0.000000e+00> : vector<32x128xf32>
    %19 = tpu.matmul %18, %15, %cst_12 {dimension_numbers = #tpu.dot_dimension_numbers<[1], [0], [0], [1], [0, 0, 1, 1], [], []>} : vector<32x128xf32>, vector<128x128xf32>, vector<32x128xf32> -> vector<32x128xf32>
    %20 = arith.mulf %17, %19 : vector<32x128xf32>
    %cst_13 = arith.constant dense<0.000000e+00> : vector<128xf32>
    %21 = vector.multi_reduction <add>, %20, %cst_13 [0] : vector<32x128xf32> to vector<128xf32>
    %22 = vector.shape_cast %21 : vector<128xf32> to vector<1x128xf32>
    %c0_14 = arith.constant 0 : index
    %c0_15 = arith.constant 0 : index
    %c0_16 = arith.constant 0 : index
    %c0_17 = arith.constant 0 : index
    %23 = vector.load %arg6[%c0_14, %c0_15, %c0_16, %c0_17] : memref<1x1x1x128xf32, #tpu.memory_space<vmem>>, vector<1x1x1x128xf32>
    %24 = vector.shape_cast %23 : vector<1x1x1x128xf32> to vector<1x128xf32>
    %25 = vector.shape_cast %22 : vector<1x128xf32> to vector<1x1x1x128xf32>
    tpu.vector_store %arg6[%c0_14, %c0_15, %c0_16, %c0_17], %25 {strides = array<i32>} : memref<1x1x1x128xf32, #tpu.memory_space<vmem>>, vector<1x1x1x128xf32>,
    return
  }
  func.func @transform_0(%arg0: i32, %arg1: i32) -> (i32, i32, i32, i32) {
    %c0_i32 = arith.constant 0 : i32
    %c0_i32_0 = arith.constant 0 : i32
    %c0_i32_1 = arith.constant 0 : i32
    return %arg0, %arg1, %c0_i32, %c0_i32_0 : i32, i32, i32, i32
  }
  func.func @transform_1(%arg0: i32, %arg1: i32) -> (i32, i32, i32, i32) {
    %c0_i32 = arith.constant 0 : i32
    %c0_i32_0 = arith.constant 0 : i32
    %c0_i32_1 = arith.constant 0 : i32
    return %arg0, %arg1, %c0_i32, %c0_i32_0 : i32, i32, i32, i32
  }
  func.func @transform_4(%arg0: i32, %arg1: i32) -> (i32, i32, i32, i32) {
    %c0_i32 = arith.constant 0 : i32
    %c0_i32_0 = arith.constant 0 : i32
    %c0_i32_1 = arith.constant 0 : i32
    return %arg0, %arg1, %c0_i32, %c0_i32_0 : i32, i32, i32, i32
  }
}

</mosaic_0001>

<llo_original>
// kernel: matrix_factorization_forward.1
$region0: #{matrix_factorization_forward.1}
  #allocation0 [shape = 'u32[]', space=smem, size = 0x4, offset = 0x4, fixed_abs, tag = 'smem constant byte address 0x4 - core index']
  #allocation1 [shape = 'u32[144,128]{1,0:T(1,128)}', space=vmem, size = 0x12000, scoped, tag = 'internal scratch']
  #allocation2 [shape = 'f32[32,128]{1,0:T(8,128)}', space=vmem, size = 0x4000, scoped, tag = 'scratch operand']
  #allocation3 [shape = 'f32[32,128]{1,0:T(8,128)}', space=vmem, size = 0x4000, scoped, tag = 'scratch operand']
  #allocation4 [shape = 's32[2]{0}', space=sflag, size = 0x8, scoped, tag = 'scratch operand']
  #allocation7 [shape = 's32[]', space=sflag, size = 0x4, offset = 0, fixed_abs, tag = 'sflag constant byte address 0x0 - dummy sync flag']
  #allocation8 [shape = 's32[]', space=sflag, size = 0x4, offset = 0, fixed_abs, tag = 'sflag constant byte address 0x0 - dummy sync flag']
  #allocation9 [shape = 'u32[]', space=smem, size = 0x4, offset = 0x44, fixed_abs, tag = 'smem constant byte address 0x44 - assertion arg 0']
  #allocation10 [shape = 'u32[]', space=smem, size = 0x4, offset = 0x48, fixed_abs, tag = 'smem constant byte address 0x48 - assertion arg 1']
  #allocation11 [shape = 's32[]', space=sflag, size = 0x4, offset = 0, fixed_abs, tag = 'sflag constant byte address 0x0 - dummy sync flag']
  #allocation12 [shape = 's32[]', space=sflag, size = 0x4, offset = 0, fixed_abs, tag = 'sflag constant byte address 0x0 - dummy sync flag']
  %s0 = inlined_call_operand.vmem [shape: s32[2,1,1,128], index: 0, kind: input, shape index: {}]
  %s1 = inlined_call_operand.vmem [shape: s32[2,1,1,128], index: 1, kind: input, shape index: {}]
  %s2 = inlined_call_operand.hbm [shape: f32[32,128], index: 2, kind: input, shape index: {}]
  %s3 = inlined_call_operand.hbm [shape: f32[32,128], index: 3, kind: input, shape index: {}]
  %s4 = inlined_call_operand.hbm [shape: f32[2,1,1,128], index: 4, kind: output, shape index: {}]
  %s5 = sld [smem:[#allocation0]]
  $region53: #{matrix_factorization_forward.1} parent=0
    _
  %s7 = ssub.s32 1, %s5
  %s8 = scalar_select 0, %s7, %s5
  $region1: #{matrix_factorization_forward.1} parent=0
    #allocation5 [shape = 'u8[1024]{0}', space=vmem, size = 0x400, scoped, tag = 'output window, operand 0']
    #allocation6 [shape = 's32[2]{0}', space=sflag, size = 0x8, scoped, tag = 'scoped memory for matrix_factorization_forward.1']
    %9 = vsyncpa [#allocation6], 0
    %s10 = scalar_lea.sflag [#allocation6], 1
    %11 = vsyncpa %s10, 0
    loop: start=0, step=1, limit=4
    $region2: #{matrix_factorization_forward.1} parent=1 // loop_pre_header
      _
    $region3: #{matrix_factorization_forward.1} parent=1 // loop_header
      %s13 = sphi 0, %s17
      %p14 = scmp.ge.s32.totalorder %s13, 4
      %s20 = sphi 0, %s32
      %s21 = sphi 0, %s28
      %s22 = sphi 0, %s20
      %s23 = sphi 0, %s21
      %s24 = sphi 0, %s22
      %s25 = sphi 0, %s23
      %s37 = sphi 0, %s39
      %s40 = sphi 0, %s37
      %s41 = sphi 0, %s40
      %s57 = sphi 0, %s41
      %s65 = sphi 0, %s67
      %s68 = sphi 0, %s65
      %s69 = sphi 0, %s68
      %s85 = sphi 0, %s69
      %s93 = sphi 0, %s95
      %s96 = sphi 0, %s93
      %s97 = sphi 0, %s96
      %s113 = sphi 0, %s97
    $region4: #{matrix_factorization_forward.1} parent=1 // loop_header_branch
      %16 = sbr.rel (%p14) target = $region8
    $region5: #{matrix_factorization_forward.1} parent=1 // loop_body
      %s18 = ssub.s32 %s13, 1
      %s19 = ssub.s32 %s13, 2
      %s26 = sadd.s32 1, %s21
      %p27 = scmp.ge.s32.totalorder %s26, 1
      %s28 = scalar_select %p27, 0, %s26
      %s29 = sadd.s32 1, %s20
      %s30 = scalar_select %p27, %s29, %s20
      %p31 = scmp.ge.s32.totalorder %s30, 2
      %s32 = scalar_select %p31, 0, %s30
      %s33 = ssub.s32 %s20, %s32
      %s34 = ssub.s32 %s21, %s28
      %s35 = sor.u32 %s33, %s34
      %p36 = scmp.eq.s32.totalorder %s35, 0
      %s38 = sadd.s32 %s37, 1
      %s39 = scalar_select %p36, %s37, %s38
      %p42 = pneg %p36
      %p43 = scmp.eq.s32.totalorder %s13, 1
      %p44 = por %p42, %p43
      %p45 = scmp.ne.s32.totalorder %s37, %s40
      %p46 = scmp.eq.s32.totalorder %s13, 0
      %p47 = por %p45, %p46
      %p48 = scmp.ne.s32.totalorder %s37, %s40
      %p49 = scmp.eq.s32.totalorder %s18, 1
      %p50 = por %p48, %p49
      %p51 = scmp.ne.s32.totalorder %s40, %s41
      %p52 = scmp.eq.s32.totalorder %s18, 0
      %p53 = por %p51, %p52
      %p54 = scmp.ne.s32.totalorder %s40, %s41
      %p55 = scmp.eq.s32.totalorder %s19, 1
      %p56 = por %p54, %p55
      %p58 = scmp.ne.s32.totalorder %s41, %s57
      %p59 = scmp.eq.s32.totalorder %s19, 0
      %p60 = por %p58, %p59
      %s61 = ssub.s32 %s20, %s32
      %s62 = ssub.s32 %s21, %s28
      %s63 = sor.u32 %s61, %s62
      %p64 = scmp.eq.s32.totalorder %s63, 0
      %s66 = sadd.s32 %s65, 1
      %s67 = scalar_select %p64, %s65, %s66
      %p70 = pneg %p64
      %p71 = scmp.eq.s32.totalorder %s13, 1
      %p72 = por %p70, %p71
      %p73 = scmp.ne.s32.totalorder %s65, %s68
      %p74 = scmp.eq.s32.totalorder %s13, 0
      %p75 = por %p73, %p74
      %p76 = scmp.ne.s32.totalorder %s65, %s68
      %p77 = scmp.eq.s32.totalorder %s18, 1
      %p78 = por %p76, %p77
      %p79 = scmp.ne.s32.totalorder %s68, %s69
      %p80 = scmp.eq.s32.totalorder %s18, 0
      %p81 = por %p79, %p80
      %p82 = scmp.ne.s32.totalorder %s68, %s69
      %p83 = scmp.eq.s32.totalorder %s19, 1
      %p84 = por %p82, %p83
      %p86 = scmp.ne.s32.totalorder %s69, %s85
      %p87 = scmp.eq.s32.totalorder %s19, 0
      %p88 = por %p86, %p87
      %s89 = ssub.s32 %s20, %s32
      %s90 = ssub.s32 %s21, %s28
      %s91 = sor.u32 %s89, %s90
      %p92 = scmp.eq.s32.totalorder %s91, 0
      %s94 = sadd.s32 %s93, 1
      %s95 = scalar_select %p92, %s93, %s94
      %p98 = pneg %p92
      %p99 = scmp.eq.s32.totalorder %s13, 1
      %p100 = por %p98, %p99
      %p101 = scmp.ne.s32.totalorder %s93, %s96
      %p102 = scmp.eq.s32.totalorder %s13, 0
      %p103 = por %p101, %p102
      %p104 = scmp.ne.s32.totalorder %s93, %s96
      %p105 = scmp.eq.s32.totalorder %s18, 1
      %p106 = por %p104, %p105
      %p107 = scmp.ne.s32.totalorder %s96, %s97
      %p108 = scmp.eq.s32.totalorder %s18, 0
      %p109 = por %p107, %p108
      %p110 = scmp.ne.s32.totalorder %s96, %s97
      %p111 = scmp.eq.s32.totalorder %s19, 1
      %p112 = por %p110, %p111
      %p114 = scmp.ne.s32.totalorder %s97, %s113
      %p115 = scmp.eq.s32.totalorder %s19, 0
      %p116 = por %p114, %p115
      %p117 = scmp.le.s32.totalorder 1, %s13
      %p118 = scmp.lt.s32.totalorder %s13, 3
      %p119 = pnand %p117, %p118
      %p120 = pneg %p119
      // Predicated region
      $region9: #{matrix_factorization_forward.1} parent=5 // pred_check
        _
      $region10: #{matrix_factorization_forward.1} parent=5 // pred_check_branch
        %122 = sbr.rel (%p119) target = $region12
      $region11: #{matrix_factorization_forward.1} parent=5 // pred_region
        %s123 = ssub.s32 %s13, 1
      $region12: #{matrix_factorization_forward.1} parent=5 // pred_fallthru
        _
      %p124 = scmp.lt.s32.totalorder %s13, 2
      // Predicated region
      $region13: #{matrix_factorization_forward.1} parent=5 // pred_check
        %p125 = pneg %p124
      $region14: #{matrix_factorization_forward.1} parent=5 // pred_check_branch
        %127 = sbr.rel (%p125) target = $region16
      $region15: #{matrix_factorization_forward.1} parent=5 // pred_region
        // Predicated region
        $region17: #{matrix_factorization_forward.1} parent=15 // pred_check
          %p128 = pneg %p47
        $region18: #{matrix_factorization_forward.1} parent=15 // pred_check_branch
          %130 = sbr.rel (%p128) target = $region20
        $region19: #{matrix_factorization_forward.1} parent=15 // pred_region
          %p131 = scmp.lt.s32.totalorder %s20, 1
          %s132 = scalar_select %p131, %s20, 1
          %p133 = scmp.lt.s32.totalorder %s21, 0
          %s134 = scalar_select %p133, %s21, 0
          %s135 = sadd.s32 %s134, %s132
          %s136 = scalar_lea.vmem %s0, %s135
        $region20: #{matrix_factorization_forward.1} parent=15 // pred_fallthru
          _
        // Predicated region
        $region21: #{matrix_factorization_forward.1} parent=15 // pred_check
          %p137 = pneg %p75
        $region22: #{matrix_factorization_forward.1} parent=15 // pred_check_branch
          %139 = sbr.rel (%p137) target = $region24
        $region23: #{matrix_factorization_forward.1} parent=15 // pred_region
          %p140 = scmp.lt.s32.totalorder %s20, 1
          %s141 = scalar_select %p140, %s20, 1
          %p142 = scmp.lt.s32.totalorder %s21, 0
          %s143 = scalar_select %p142, %s21, 0
          %s144 = sadd.s32 %s143, %s141
          %s145 = scalar_lea.vmem %s1, %s144
        $region24: #{matrix_factorization_forward.1} parent=15 // pred_fallthru
          _
      $region16: #{matrix_factorization_forward.1} parent=5 // pred_fallthru
        _
      %p146 = scmp.le.s32.totalorder 1, %s13
      %p147 = scmp.lt.s32.totalorder %s13, 3
      %p148 = pnand %p146, %p147
      %p149 = pneg %p148
      // Predicated region
      $region25: #{matrix_factorization_forward.1} parent=5 // pred_check
        _
      $region26: #{matrix_factorization_forward.1} parent=5 // pred_check_branch
        %151 = sbr.rel (%p148) target = $region28
      $region27: #{matrix_factorization_forward.1} parent=5 // pred_region
        %s152 = ssub.s32 %s13, 1
        %p153 = scmp.lt.s32.totalorder %s22, 1
        %s154 = scalar_select %p153, %s22, 1
        %p155 = scmp.lt.s32.totalorder %s23, 0
        %s156 = scalar_select %p155, %s23, 0
        %s157 = sadd.s32 %s156, %s154
        %s158 = scalar_lea.vmem %s0, %s157
        %p159 = pneg %p53
        %p160 = pneg %p50
        %p161 = scmp.lt.s32.totalorder %s22, 1
        %s162 = scalar_select %p161, %s22, 1
        %p163 = scmp.lt.s32.totalorder %s23, 0
        %s164 = scalar_select %p163, %s23, 0
        %s165 = sadd.s32 %s164, %s162
        %s166 = scalar_lea.vmem %s1, %s165
        %p167 = pneg %p81
        %p168 = pneg %p78
        %p169 = pneg %p109
        %p170 = pneg %p106
        %s171 = sand.u32 %s96, 1
        %s172 = scalar_lea.sflag [#allocation6], %s171
        %s173 = sand.u32 %s96, 1
        %s174 = scalar_lea.vmem [#allocation5], %s173
        %p175 = scmp.lt.s32.totalorder %s22, 1
        %s176 = scalar_select %p175, %s22, 1
        %p177 = scmp.lt.s32.totalorder %s23, 0
        %s178 = scalar_select %p177, %s23, 0
        %s179 = sadd.s32 %s178, %s176
        %s180 = scalar_lea.vmem %s0, %s179
        %p181 = scmp.lt.s32.totalorder %s22, 1
        %s182 = scalar_select %p181, %s22, 1
        %p183 = scmp.lt.s32.totalorder %s23, 0
        %s184 = scalar_select %p183, %s23, 0
        %s185 = sadd.s32 %s184, %s182
        %s186 = scalar_lea.vmem %s1, %s185
        %p187 = scmp.eq.s32.totalorder %s23, 0
        // Predicated region
        $region29: #{matrix_factorization_forward.1} parent=27 // pred_check
          %p188 = pneg %p187
        $region30: #{matrix_factorization_forward.1} parent=27 // pred_check_branch
          %190 = sbr.rel (%p188) target = $region32
        $region31: #{matrix_factorization_forward.1} parent=27 // pred_region
          // Predicated region
          $region33: #{matrix_factorization_forward.1} parent=31 // pred_check
            _
          $region34: #{matrix_factorization_forward.1} parent=31 // pred_check_branch
            %192 = sbr.rel target = $region36
          $region35: #{matrix_factorization_forward.1} parent=31 // pred_region
            %193 = sst [smem:[#allocation9]] [#allocation8]
            %194 = sst [smem:[#allocation10]] [#allocation7]
          $region36: #{matrix_factorization_forward.1} parent=31 // pred_fallthru
            _
          %196 = shalt.err (0)
          %s198 = sshll.u32 [#allocation2], 4
          %s199 = int_to_ptr.vmem [resolvable:$true] %s198
          %201 = dma.hbm_to_vmem [thread:$0]  %s2, 512, %s199, [#allocation4]
          %s202 = scalar_lea.sflag [#allocation4], 1
          // Predicated region
          $region37: #{matrix_factorization_forward.1} parent=31 // pred_check
            _
          $region38: #{matrix_factorization_forward.1} parent=31 // pred_check_branch
            %204 = sbr.rel target = $region40
          $region39: #{matrix_factorization_forward.1} parent=31 // pred_region
            %205 = sst [smem:[#allocation9]] [#allocation12]
            %206 = sst [smem:[#allocation10]] [#allocation11]
          $region40: #{matrix_factorization_forward.1} parent=31 // pred_fallthru
            _
          %208 = shalt.err (0)
          %s210 = sshll.u32 [#allocation3], 4
          %s211 = int_to_ptr.vmem [resolvable:$true] %s210
          %213 = dma.hbm_to_vmem [thread:$0]  %s3, 512, %s211, %s202
          %s214 = smul.u32 32, 1
          %s215 = sshll.u32 %s214, 4
          %216 = dma.done [#allocation4], %s215
          %s217 = sshll.u32 %s214, 4
          %218 = dma.done %s202, %s217
        $region32: #{matrix_factorization_forward.1} parent=27 // pred_fallthru
          _
        %v219 = vlaneseq
        %v220 = vshrl.u32 %v219, 7
        %v221 = vadd.s32 %v220, 8
        %v222 = vadd.s32 %v220, 16
        %v223 = vadd.s32 %v220, 24
        %v224 = vadd.s32 %v220, 32
        %v225 = vadd.s32 %v220, 40
        %v226 = vadd.s32 %v220, 48
        %v227 = vadd.s32 %v220, 56
        %v228 = vadd.s32 %v220, 64
        %v229 = vadd.s32 %v220, 72
        %v230 = vadd.s32 %v220, 80
        %v231 = vadd.s32 %v220, 88
        %v232 = vadd.s32 %v220, 96
        %v233 = vadd.s32 %v220, 104
        %v234 = vadd.s32 %v220, 112
        %v235 = vadd.s32 %v220, 120
        %v236 = vld [vmem:[%s180] sm:$0x1]
        %v237 = vlaneseq
        %v238 = vshrl.u32 %v237, 7
        %v239 = vsub.s32 0, %v238
        %v240 = vrot.slane %v236, %v239
        %vm241 = vcmp.eq.s32.totalorder %v220, %v240
        %vm242 = vcmp.eq.s32.totalorder %v221, %v240
        %vm243 = vcmp.eq.s32.totalorder %v222, %v240
        %vm244 = vcmp.eq.s32.totalorder %v223, %v240
        %vm245 = vcmp.eq.s32.totalorder %v224, %v240
        %vm246 = vcmp.eq.s32.totalorder %v225, %v240
        %vm247 = vcmp.eq.s32.totalorder %v226, %v240
        %vm248 = vcmp.eq.s32.totalorder %v227, %v240
        %vm249 = vcmp.eq.s32.totalorder %v228, %v240
        %vm250 = vcmp.eq.s32.totalorder %v229, %v240
        %vm251 = vcmp.eq.s32.totalorder %v230, %v240
        %vm252 = vcmp.eq.s32.totalorder %v231, %v240
        %vm253 = vcmp.eq.s32.totalorder %v232, %v240
        %vm254 = vcmp.eq.s32.totalorder %v233, %v240
        %vm255 = vcmp.eq.s32.totalorder %v234, %v240
        %vm256 = vcmp.eq.s32.totalorder %v235, %v240
        %v257 = vsel %vm241, 1, 0
        %v258 = vsel %vm242, 1, 0
        %v259 = vsel %vm243, 1, 0
        %v260 = vsel %vm244, 1, 0
        %v261 = vsel %vm245, 1, 0
        %v262 = vsel %vm246, 1, 0
        %v263 = vsel %vm247, 1, 0
        %v264 = vsel %vm248, 1, 0
        %v265 = vsel %vm249, 1, 0
        %v266 = vsel %vm250, 1, 0
        %v267 = vsel %vm251, 1, 0
        %v268 = vsel %vm252, 1, 0
        %v269 = vsel %vm253, 1, 0
        %v270 = vsel %vm254, 1, 0
        %v271 = vsel %vm255, 1, 0
        %v272 = vsel %vm256, 1, 0
        %v273 = vcvt.s32.f32 %v257
        %v274 = vcvt.s32.f32 %v258
        %v275 = vcvt.s32.f32 %v259
        %v276 = vcvt.s32.f32 %v260
        %v277 = vcvt.s32.f32 %v261
        %v278 = vcvt.s32.f32 %v262
        %v279 = vcvt.s32.f32 %v263
        %v280 = vcvt.s32.f32 %v264
        %v281 = vcvt.s32.f32 %v265
        %v282 = vcvt.s32.f32 %v266
        %v283 = vcvt.s32.f32 %v267
        %v284 = vcvt.s32.f32 %v268
        %v285 = vcvt.s32.f32 %v269
        %v286 = vcvt.s32.f32 %v270
        %v287 = vcvt.s32.f32 %v271
        %v288 = vcvt.s32.f32 %v272
        %v289 = vld [vmem:[%s186] sm:$0x1]
        %v290 = vlaneseq
        %v291 = vshrl.u32 %v290, 7
        %v292 = vsub.s32 0, %v291
        %v293 = vrot.slane %v289, %v292
        %vm294 = vcmp.eq.s32.totalorder %v220, %v293
        %vm295 = vcmp.eq.s32.totalorder %v221, %v293
        %vm296 = vcmp.eq.s32.totalorder %v222, %v293
        %vm297 = vcmp.eq.s32.totalorder %v223, %v293
        %vm298 = vcmp.eq.s32.totalorder %v224, %v293
        %vm299 = vcmp.eq.s32.totalorder %v225, %v293
        %vm300 = vcmp.eq.s32.totalorder %v226, %v293
        %vm301 = vcmp.eq.s32.totalorder %v227, %v293
        %vm302 = vcmp.eq.s32.totalorder %v228, %v293
        %vm303 = vcmp.eq.s32.totalorder %v229, %v293
        %vm304 = vcmp.eq.s32.totalorder %v230, %v293
        %vm305 = vcmp.eq.s32.totalorder %v231, %v293
        %vm306 = vcmp.eq.s32.totalorder %v232, %v293
        %vm307 = vcmp.eq.s32.totalorder %v233, %v293
        %vm308 = vcmp.eq.s32.totalorder %v234, %v293
        %vm309 = vcmp.eq.s32.totalorder %v235, %v293
        %v310 = vsel %vm294, 1, 0
        %v311 = vsel %vm295, 1, 0
        %v312 = vsel %vm296, 1, 0
        %v313 = vsel %vm297, 1, 0
        %v314 = vsel %vm298, 1, 0
        %v315 = vsel %vm299, 1, 0
        %v316 = vsel %vm300, 1, 0
        %v317 = vsel %vm301, 1, 0
        %v318 = vsel %vm302, 1, 0
        %v319 = vsel %vm303, 1, 0
        %v320 = vsel %vm304, 1, 0
        %v321 = vsel %vm305, 1, 0
        %v322 = vsel %vm306, 1, 0
        %v323 = vsel %vm307, 1, 0
        %v324 = vsel %vm308, 1, 0
        %v325 = vsel %vm309, 1, 0
        %v326 = vcvt.s32.f32 %v310
        %v327 = vcvt.s32.f32 %v311
        %v328 = vcvt.s32.f32 %v312
        %v329 = vcvt.s32.f32 %v313
        %v330 = vcvt.s32.f32 %v314
        %v331 = vcvt.s32.f32 %v315
        %v332 = vcvt.s32.f32 %v316
        %v333 = vcvt.s32.f32 %v317
        %v334 = vcvt.s32.f32 %v318
        %v335 = vcvt.s32.f32 %v319
        %v336 = vcvt.s32.f32 %v320
        %v337 = vcvt.s32.f32 %v321
        %v338 = vcvt.s32.f32 %v322
        %v339 = vcvt.s32.f32 %v323
        %v340 = vcvt.s32.f32 %v324
        %v341 = vcvt.s32.f32 %v325
        %v342 = vld [vmem:[#allocation2] sm:$0xff]
        %v343 = vld [vmem:[#allocation2 + $0x8] sm:$0xff]
        %v344 = vld [vmem:[#allocation2 + $0x10] sm:$0xff]
        %v345 = vld [vmem:[#allocation2 + $0x18] sm:$0xff]
        %346 = vmatprep.subr.mxu0 0.0
        %347 = vmatpush1.msra.mxu0 %v273
        %348 = vmatprep.subr.mxu0 0.0
        %349 = vmatpush1.msra.mxu0 %v274
        %350 = vmatprep.subr.mxu0 0.0
        %351 = vmatpush1.msra.mxu0 %v275
        %352 = vmatprep.subr.mxu0 0.0
        %353 = vmatpush1.msra.mxu0 %v276
        %354 = vmatprep.subr.mxu0 0.0
        %355 = vmatpush1.msra.mxu0 %v277
        %356 = vmatprep.subr.mxu0 0.0
        %357 = vmatpush1.msra.mxu0 %v278
        %358 = vmatprep.subr.mxu0 0.0
        %359 = vmatpush1.msra.mxu0 %v279
        %360 = vmatprep.subr.mxu0 0.0
        %361 = vmatpush1.msra.mxu0 %v280
        %362 = vmatprep.subr.mxu0 0.0
        %363 = vmatpush1.msra.mxu0 %v281
        %364 = vmatprep.subr.mxu0 0.0
        %365 = vmatpush1.msra.mxu0 %v282
        %366 = vmatprep.subr.mxu0 0.0
        %367 = vmatpush1.msra.mxu0 %v283
        %368 = vmatprep.subr.mxu0 0.0
        %369 = vmatpush1.msra.mxu0 %v284
        %370 = vmatprep.subr.mxu0 0.0
        %371 = vmatpush1.msra.mxu0 %v285
        %372 = vmatprep.subr.mxu0 0.0
        %373 = vmatpush1.msra.mxu0 %v286
        %374 = vmatprep.subr.mxu0 0.0
        %375 = vmatpush1.msra.mxu0 %v287
        %376 = vmatprep.subr.mxu0 0.0
        %377 = vmatpush1.msra.mxu0 %v288
        %378 = vmatprep.subr.mxu0 0.0
        %379 = vmatpush1.msra.mxu0 0.0
        %380 = vmatprep.subr.mxu0 0.0
        %381 = vmatpush1.msra.mxu0 0.0
        %382 = vmatprep.subr.mxu0 0.0
        %383 = vmatpush1.msra.mxu0 0.0
        %384 = vmatprep.subr.mxu0 0.0
        %385 = vmatpush1.msra.mxu0 0.0
        %386 = vmatprep.subr.mxu0 0.0
        %387 = vmatpush1.msra.mxu0 0.0
        %388 = vmatprep.subr.mxu0 0.0
        %389 = vmatpush1.msra.mxu0 0.0
        %390 = vmatprep.subr.mxu0 0.0
        %391 = vmatpush1.msra.mxu0 0.0
        %392 = vmatprep.subr.mxu0 0.0
        %393 = vmatpush1.msra.mxu0 0.0
        %394 = vmatprep.subr.mxu0 0.0
        %395 = vmatpush1.msra.mxu0 0.0
        %396 = vmatprep.subr.mxu0 0.0
        %397 = vmatpush1.msra.mxu0 0.0
        %398 = vmatprep.subr.mxu0 0.0
        %399 = vmatpush1.msra.mxu0 0.0
        %400 = vmatprep.subr.mxu0 0.0
        %401 = vmatpush1.msra.mxu0 0.0
        %402 = vmatprep.subr.mxu0 0.0
        %403 = vmatpush1.msra.mxu0 0.0
        %404 = vmatprep.subr.mxu0 0.0
        %405 = vmatpush1.msra.mxu0 0.0
        %406 = vmatprep.subr.mxu0 0.0
        %407 = vmatpush1.msra.mxu0 0.0
        %408 = vmatprep.subr.mxu0 0.0
        %409 = vmatpush1.msra.mxu0 0.0
        %410 = vmatprep.mubr.f32.mxu0 0.0
        %411 = vmatmul.mubr.f32.gmra.mrb[0].mxu0 %v342
        %v412 = vpop.f32.mrb[0].mxu0
        %v413 = vadd.f32 0.0, %v412
        %v414 = vpop.f32.mrb[0].mxu0
        %415 = vmatprep.mubr.f32.mxu0 0.0
        %416 = vmatmul.mubr.f32.gmra.mrb[0].mxu0 %v343
        %v417 = vpop.f32.mrb[0].mxu0
        %v418 = vadd.f32 0.0, %v417
        %v419 = vpop.f32.mrb[0].mxu0
        %420 = vmatprep.mubr.f32.mxu0 0.0
        %421 = vmatmul.mubr.f32.gmra.mrb[0].mxu0 %v344
        %v422 = vpop.f32.mrb[0].mxu0
        %v423 = vadd.f32 0.0, %v422
        %v424 = vpop.f32.mrb[0].mxu0
        %425 = vmatprep.mubr.f32.mxu0 0.0
        %426 = vmatmul.mubr.f32.gmra.mrb[0].mxu0 %v345
        %v427 = vpop.f32.mrb[0].mxu0
        %v428 = vadd.f32 0.0, %v427
        %v429 = vpop.f32.mrb[0].mxu0
        %430 = vdwg.mxu0
        %v431 = vld [vmem:[#allocation3] sm:$0xff]
        %v432 = vld [vmem:[#allocation3 + $0x8] sm:$0xff]
        %v433 = vld [vmem:[#allocation3 + $0x10] sm:$0xff]
        %v434 = vld [vmem:[#allocation3 + $0x18] sm:$0xff]
        %435 = vmatprep.subr.mxu0 0.0
        %436 = vmatpush1.msra.mxu0 %v326
        %437 = vmatprep.subr.mxu0 0.0
        %438 = vmatpush1.msra.mxu0 %v327
        %439 = vmatprep.subr.mxu0 0.0
        %440 = vmatpush1.msra.mxu0 %v328
        %441 = vmatprep.subr.mxu0 0.0
        %442 = vmatpush1.msra.mxu0 %v329
        %443 = vmatprep.subr.mxu0 0.0
        %444 = vmatpush1.msra.mxu0 %v330
        %445 = vmatprep.subr.mxu0 0.0
        %446 = vmatpush1.msra.mxu0 %v331
        %447 = vmatprep.subr.mxu0 0.0
        %448 = vmatpush1.msra.mxu0 %v332
        %449 = vmatprep.subr.mxu0 0.0
        %450 = vmatpush1.msra.mxu0 %v333
        %451 = vmatprep.subr.mxu0 0.0
        %452 = vmatpush1.msra.mxu0 %v334
        %453 = vmatprep.subr.mxu0 0.0
        %454 = vmatpush1.msra.mxu0 %v335
        %455 = vmatprep.subr.mxu0 0.0
        %456 = vmatpush1.msra.mxu0 %v336
        %457 = vmatprep.subr.mxu0 0.0
        %458 = vmatpush1.msra.mxu0 %v337
        %459 = vmatprep.subr.mxu0 0.0
        %460 = vmatpush1.msra.mxu0 %v338
        %461 = vmatprep.subr.mxu0 0.0
        %462 = vmatpush1.msra.mxu0 %v339
        %463 = vmatprep.subr.mxu0 0.0
        %464 = vmatpush1.msra.mxu0 %v340
        %465 = vmatprep.subr.mxu0 0.0
        %466 = vmatpush1.msra.mxu0 %v341
        %467 = vmatprep.subr.mxu0 0.0
        %468 = vmatpush1.msra.mxu0 0.0
        %469 = vmatprep.subr.mxu0 0.0
        %470 = vmatpush1.msra.mxu0 0.0
        %471 = vmatprep.subr.mxu0 0.0
        %472 = vmatpush1.msra.mxu0 0.0
        %473 = vmatprep.subr.mxu0 0.0
        %474 = vmatpush1.msra.mxu0 0.0
        %475 = vmatprep.subr.mxu0 0.0
        %476 = vmatpush1.msra.mxu0 0.0
        %477 = vmatprep.subr.mxu0 0.0
        %478 = vmatpush1.msra.mxu0 0.0
        %479 = vmatprep.subr.mxu0 0.0
        %480 = vmatpush1.msra.mxu0 0.0
        %481 = vmatprep.subr.mxu0 0.0
        %482 = vmatpush1.msra.mxu0 0.0
        %483 = vmatprep.subr.mxu0 0.0
        %484 = vmatpush1.msra.mxu0 0.0
        %485 = vmatprep.subr.mxu0 0.0
        %486 = vmatpush1.msra.mxu0 0.0
        %487 = vmatprep.subr.mxu0 0.0
        %488 = vmatpush1.msra.mxu0 0.0
        %489 = vmatprep.subr.mxu0 0.0
        %490 = vmatpush1.msra.mxu0 0.0
        %491 = vmatprep.subr.mxu0 0.0
        %492 = vmatpush1.msra.mxu0 0.0
        %493 = vmatprep.subr.mxu0 0.0
        %494 = vmatpush1.msra.mxu0 0.0
        %495 = vmatprep.subr.mxu0 0.0
        %496 = vmatpush1.msra.mxu0 0.0
        %497 = vmatprep.subr.mxu0 0.0
        %498 = vmatpush1.msra.mxu0 0.0
        %499 = vmatprep.mubr.f32.mxu0 0.0
        %500 = vmatmul.mubr.f32.gmra.mrb[0].mxu0 %v431
        %v501 = vpop.f32.mrb[0].mxu0
        %v502 = vadd.f32 0.0, %v501
        %v503 = vpop.f32.mrb[0].mxu0
        %504 = vmatprep.mubr.f32.mxu0 0.0
        %505 = vmatmul.mubr.f32.gmra.mrb[0].mxu0 %v432
        %v506 = vpop.f32.mrb[0].mxu0
        %v507 = vadd.f32 0.0, %v506
        %v508 = vpop.f32.mrb[0].mxu0
        %509 = vmatprep.mubr.f32.mxu0 0.0
        %510 = vmatmul.mubr.f32.gmra.mrb[0].mxu0 %v433
        %v511 = vpop.f32.mrb[0].mxu0
        %v512 = vadd.f32 0.0, %v511
        %v513 = vpop.f32.mrb[0].mxu0
        %514 = vmatprep.mubr.f32.mxu0 0.0
        %515 = vmatmul.mubr.f32.gmra.mrb[0].mxu0 %v434
        %v516 = vpop.f32.mrb[0].mxu0
        %v517 = vadd.f32 0.0, %v516
        %v518 = vpop.f32.mrb[0].mxu0
        %519 = vdwg.mxu0
        %v520 = vmul.f32 %v413, %v502
        %v521 = vmul.f32 %v418, %v507
        %v522 = vmul.f32 %v423, %v512
        %v523 = vmul.f32 %v428, %v517
        %v524 = vadd.f32 %v520, %v521
        %v525 = vadd.f32 %v524, %v522
        %v526 = vadd.f32 %v525, %v523
        %v527 = vrot.slane %v526, 4
        %v528 = vadd.f32 %v526, %v527
        %v529 = vrot.slane %v528, 2
        %v530 = vadd.f32 %v528, %v529
        %v531 = vrot.slane %v530, 1
        %v532 = vadd.f32 %v530, %v531
        %533 = vst [vmem:[%s174] sm:$0x1] %v532
        %s534 = sand.u32 %s96, 1
        %s535 = scalar_lea.sflag [#allocation6], %s534
        %s536 = sand.u32 %s96, 1
        %s537 = scalar_lea.vmem [#allocation5], %s536
        // Predicated region
        $region41: #{matrix_factorization_forward.1} parent=27 // pred_check
          %p538 = pneg %p106
        $region42: #{matrix_factorization_forward.1} parent=27 // pred_check_branch
          %540 = sbr.rel (%p538) target = $region44
        $region43: #{matrix_factorization_forward.1} parent=27 // pred_region
          %s542 = ssub.s32 16, 16
          %543 = vsyncadd %s535, %s542
          %s544 = sadd.s32 %s23, %s22
          %s545 = smul.addr %s544, 16
          %s546 = scalar_lea.hbm %s4, %s545
          %s548 = sshll.u32 %s537, 4
          %s549 = int_to_ptr.vmem [resolvable:$true] %s548
          %551 = dma.vmem_to_hbm [thread:$0]  %s549, 16, %s546, %s535
        $region44: #{matrix_factorization_forward.1} parent=27 // pred_fallthru
          _
      $region28: #{matrix_factorization_forward.1} parent=5 // pred_fallthru
        _
      %p552 = scmp.le.s32.totalorder 2, %s13
      // Predicated region
      $region45: #{matrix_factorization_forward.1} parent=5 // pred_check
        %p553 = pneg %p552
      $region46: #{matrix_factorization_forward.1} parent=5 // pred_check_branch
        %555 = sbr.rel (%p553) target = $region48
      $region47: #{matrix_factorization_forward.1} parent=5 // pred_region
        %s556 = ssub.s32 %s13, 2
        // Predicated region
        $region49: #{matrix_factorization_forward.1} parent=47 // pred_check
          %p557 = pneg %p112
        $region50: #{matrix_factorization_forward.1} parent=47 // pred_check_branch
          %559 = sbr.rel (%p557) target = $region52
        $region51: #{matrix_factorization_forward.1} parent=47 // pred_region
          %s560 = sand.u32 %s97, 1
          %s561 = scalar_lea.sflag [#allocation6], %s560
          %s562 = sand.u32 %s97, 1
          %s563 = scalar_lea.vmem [#allocation5], %s562
          %564 = dma.done %s561, 16
        $region52: #{matrix_factorization_forward.1} parent=47 // pred_fallthru
          _
      $region48: #{matrix_factorization_forward.1} parent=5 // pred_fallthru
        _
    $region6: #{matrix_factorization_forward.1} parent=1 // loop_footer
      %s17 = sadd.s32 1, %s13
    $region7: #{matrix_factorization_forward.1} parent=1 // loop_footer_branch
      %12 = sbr.rel target = $region3
    $region8: #{matrix_factorization_forward.1} parent=1 // loop_exit
      _
    %565 = vsyncpa [#allocation6], 1
    %s566 = scalar_lea.sflag [#allocation6], 1
    %567 = vsyncpa %s566, 1
  %568 = vsyncmov [#allocation4]
  %s569 = vpop.sfrf %568
  %p570 = scmp.eq.s32.totalorder %s569, 0
  %p571 = pneg %p570
  %573 = shalt.err (%p571)
  %s574 = scalar_lea.sflag [#allocation4], 1
  %575 = vsyncmov %s574
  %s576 = vpop.sfrf %575
  %p577 = scmp.eq.s32.totalorder %s576, 0
  %p578 = pneg %p577
  %580 = shalt.err (%p578)

</llo_original>
